<compile_context>
chip_gen: v5e
topology: v5e:2x2
jax: 0.10.0
libtpu: 0.0.40
codegen_flags: <defaults>
</compile_context>

<pallas_src>
import numpy as np
import jax
import jax.numpy as jnp
from jax.experimental import pallas as pl
from jax.experimental.pallas import tpu as pltpu

try:
    from scipy.optimize import linear_sum_assignment as _scipy_lsa
except Exception:  # pragma: no cover - scipy optional
    _scipy_lsa = None


def _round_up(x: int, m: int) -> int:
    return ((x + m - 1) // m) * m


def _cdiv(a: int, b: int) -> int:
    return (a + b - 1) // b


def _kernel_act_dtype(dt):
    # keep bf16 inputs at bf16 (halves HBM traffic); everything else goes f32
    return dt if dt == jnp.bfloat16 else jnp.float32


# --------------------------------------------------------------------------
# Pallas kernel: one row-tile of the cost matrix.
#   logits_ref : [TILE_N, C]      (native columns, no padding needed)
#   left_ref   : [TILE_N, L]
#   right_ref  : [TILE_N, L]
#   oh_cls_ref : [C, T_pad]       (-cost_class_w at (gt_ids[t], t), else 0)
#   oh_l_ref   : [L, T_pad]       (-cost_span_w  at (gt_left[t], t), else 0)
#   oh_r_ref   : [L, T_pad]       (-cost_span_w  at (gt_right[t], t), else 0)
#   c_ref      : [TILE_N, T_pad]
# --------------------------------------------------------------------------
def _cost_kernel(logits_ref, left_ref, right_ref,
                 oh_cls_ref, oh_l_ref, oh_r_ref, c_ref):
    logits = logits_ref[...].astype(jnp.float32)               # [tn, C]
    m = jnp.max(logits, axis=-1, keepdims=True)
    e = jnp.exp(logits - m)                                    # EUP
    denom = jnp.sum(e, axis=-1, keepdims=True)                 # [tn, 1]

    # class term: (-w_cls) * e[:, gt_ids]   (softmax normalisation deferred)
    cls_part = jnp.dot(e, oh_cls_ref[...].astype(jnp.float32),
                       preferred_element_type=jnp.float32)     # [tn, T_pad]
    # span term: (-w_span) * (left[:, gt_left] + right[:, gt_right])
    span_part = jnp.dot(left_ref[...], oh_l_ref[...],
                        preferred_element_type=jnp.float32)
    span_part = span_part + jnp.dot(right_ref[...], oh_r_ref[...],
                                    preferred_element_type=jnp.float32)

    inv = pl.reciprocal(denom, approx=False)                   # exact 1/sum
    c_ref[...] = (cls_part * inv + span_part).astype(c_ref.dtype)


def hungarian_cost_matrix(pred_logits, pred_left, pred_right,
                          gt_ids, gt_left, gt_right,
                          cost_class: float = 1.0, cost_span: float = 1.0):
    """Builds C[bs, num_queries, T] exactly like HungarianMatcher.forward."""
    bs, num_queries, num_classes = pred_logits.shape
    seq_len = pred_left.shape[-1]
    T = int(gt_ids.shape[0])
    N = bs * num_queries

    # lane-dense output (padded gt columns use a -1 sentinel -> zero cost)
    T_pad = _round_up(max(T, 1), 128)

    # ---- activations: native shapes, no padded copies, dtype preserved -----
    logits2d = pred_logits.reshape(N, num_classes)
    logits2d = logits2d.astype(_kernel_act_dtype(logits2d.dtype))
    span_dtype = _kernel_act_dtype(pred_left.dtype)
    left2d = pred_left.reshape(N, seq_len).astype(span_dtype)
    right2d = pred_right.reshape(N, seq_len).astype(span_dtype)

    # ---- loop-invariant one-hot matrices, weights/sign folded in -----------
    gt_ids_p = jnp.full((T_pad,), -1, jnp.int32).at[:T].set(
        jnp.asarray(gt_ids, jnp.int32))
    gt_left_p = jnp.full((T_pad,), -1, jnp.int32).at[:T].set(
        jnp.asarray(gt_left, jnp.int32))
    gt_right_p = jnp.full((T_pad,), -1, jnp.int32).at[:T].set(
        jnp.asarray(gt_right, jnp.int32))

    cls_rows = jnp.arange(num_classes, dtype=jnp.int32)[:, None]
    oh_cls = jnp.where(cls_rows == gt_ids_p[None, :],
                       jnp.float32(-cost_class),
                       jnp.float32(0.0))                        # [C, T_pad]
    seq_rows = jnp.arange(seq_len, dtype=jnp.int32)[:, None]
    oh_l = jnp.where(seq_rows == gt_left_p[None, :],
                     -cost_span, 0.0).astype(span_dtype)        # [L, T_pad]
    oh_r = jnp.where(seq_rows == gt_right_p[None, :],
                     -cost_span, 0.0).astype(span_dtype)        # [L, T_pad]

    # ---- TILE_N from an explicit VMEM budget (v5e 16MiB scoped default,
    #      v7x 64 MiB physical) + cap so grid >= 2 (both v7x TCs get work) ---
    try:
        vmem_cap = int(pltpu.get_tpu_info().vmem_capacity_bytes)
    except Exception:
        vmem_cap = 64 << 20            # conservative: v7x per-core VMEM
    vmem_budget = (vmem_cap * 3) // 4  # headroom for compiler scratch

    logit_isz = jnp.dtype(logits2d.dtype).itemsize
    span_isz = jnp.dtype(span_dtype).itemsize
    oh_bytes = (num_classes * 4 + 2 * seq_len * span_isz) * T_pad
    per_row = 2 * (num_classes * logit_isz
                   + 2 * seq_len * span_isz
                   + T_pad * 4)        # double-buffered inputs + f32 output

    tile_budget = (vmem_budget - 2 * oh_bytes) // max(per_row, 1)
    tile_budget = max(8, (tile_budget // 8) * 8)
    tile_cap = max(8, _round_up(_cdiv(N, 2), 8))   # grid length >= 2
    TILE_N = max(8, min(1024, tile_budget, tile_cap))
    grid = (pl.cdiv(N, TILE_N),)       # ragged last tile; no N over-padding

    footprint = TILE_N * per_row + 2 * oh_bytes
    vmem_limit = int(min(vmem_cap, footprint + (16 << 20)))

    cost_estimate = pl.CostEstimate(
        flops=2 * N * (num_classes + 2 * seq_len) * T_pad,
        transcendentals=N * num_classes,
        bytes_accessed=(N * (num_classes * logit_isz + 2 * seq_len * span_isz
                             + T_pad * 4)
                        + oh_bytes),
    )

    def _build(single_buffer_resident: bool):
        res_kwargs = ({"pipeline_mode": pl.Buffered(1)}
                      if single_buffer_resident else {})
        in_specs = [
            pl.BlockSpec((TILE_N, num_classes), lambda i: (i, 0)),  # row-tiled
            pl.BlockSpec((TILE_N, seq_len), lambda i: (i, 0)),      # row-tiled
            pl.BlockSpec((TILE_N, seq_len), lambda i: (i, 0)),      # row-tiled
            pl.BlockSpec((num_classes, T_pad), lambda i: (0, 0), **res_kwargs),
            pl.BlockSpec((seq_len, T_pad), lambda i: (0, 0), **res_kwargs),
            pl.BlockSpec((seq_len, T_pad), lambda i: (0, 0), **res_kwargs),
        ]
        return pl.pallas_call(
            _cost_kernel,
            out_shape=jax.ShapeDtypeStruct((N, T_pad), jnp.float32),
            grid=grid,
            in_specs=in_specs,
            out_specs=pl.BlockSpec((TILE_N, T_pad), lambda i: (i, 0)),
            compiler_params=pltpu.CompilerParams(
                dimension_semantics=("parallel",),
                vmem_limit_bytes=vmem_limit),
            cost_estimate=cost_estimate,
        )

    args = (logits2d, left2d, right2d, oh_cls, oh_l, oh_r)
    if hasattr(pl, "Buffered"):
        try:
            c_flat = _build(True)(*args)      # single-buffer resident one-hots
        except Exception:
            c_flat = _build(False)(*args)     # fall back to default pipelining
    else:
        c_flat = _build(False)(*args)

    return c_flat[:, :T].reshape(bs, num_queries, T)


# --------------------------------------------------------------------------
# Host-side exact LAP solve. Prefers scipy.optimize.linear_sum_assignment;
# falls back to a pure-Python shortest-augmenting-path solver.
# --------------------------------------------------------------------------
def _hungarian(cost):
    """Min-cost assignment for n x m cost with n <= m. Returns (rows, cols)."""
    cost = np.asarray(cost, dtype=np.float64)
    n, m = cost.shape
    assert n <= m
    INF = float("inf")
    u = [0.0] * (n + 1)
    v = [0.0] * (m + 1)
    p = [0] * (m + 1)
    way = [0] * (m + 1)
    for i in range(1, n + 1):
        p[0] = i
        j0 = 0
        minv = [INF] * (m + 1)
        used = [False] * (m + 1)
        while True:
            used[j0] = True
            i0 = p[j0]
            delta = INF
            j1 = 0
            for j in range(1, m + 1):
                if not used[j]:
                    cur = cost[i0 - 1, j - 1] - u[i0] - v[j]
                    if cur < minv[j]:
                        minv[j] = cur
                        way[j] = j0
                    if minv[j] < delta:
                        delta = minv[j]
                        j1 = j
            for j in range(m + 1):
                if used[j]:
                    u[p[j]] += delta
                    v[j] -= delta
                else:
                    minv[j] -= delta
            j0 = j1
            if p[j0] == 0:
                break
        while True:
            j1 = way[j0]
            p[j0] = p[j1]
            j0 = j1
            if j0 == 0:
                break
    rows, cols = [], []
    for j in range(1, m + 1):
        if p[j] != 0:
            rows.append(p[j] - 1)
            cols.append(j - 1)
    order = np.argsort(rows)
    return (np.asarray(rows, np.int64)[order], np.asarray(cols, np.int64)[order])


def _lap(cost):
    cost = np.asarray(cost, dtype=np.float64)
    if _scipy_lsa is not None:
        r, c = _scipy_lsa(cost)                 # row indices are sorted
        return np.asarray(r, np.int64), np.asarray(c, np.int64)
    if cost.shape[0] <= cost.shape[1]:
        return _hungarian(cost)
    cols, rows = _hungarian(cost.T)
    order = np.argsort(rows)
    return rows[order], cols[order]


def hungarian_matcher_forward(outputs, targets,
                              cost_class: float = 1.0, cost_span: float = 1.0):
    """Mirror of HungarianMatcher.forward: Pallas cost matrix + exact LAP."""
    C = hungarian_cost_matrix(outputs["pred_logits"], outputs["pred_left"],
                              outputs["pred_right"], targets["labels"],
                              targets["gt_left"], targets["gt_right"],
                              cost_class=cost_class, cost_span=cost_span)
    # TODO(synk): the LAP solve (lapjv/hungarian/auction) is a sequential
    # combinatorial algorithm with no Pallas equivalent; it runs on host and
    # forces one device->host sync per forward.
    C_np = np.asarray(jax.block_until_ready(C))
    sizes = targets["sizes"]

    indices = []
    col_start = 0
    for size in sizes:
        sub = C_np[:, :, col_start:col_start + size][len(indices)]
        col_start += size
        indices.append(_lap(sub))
    return C, indices


def _reference_cost_matrix(pred_logits, pred_left, pred_right,
                           gt_ids, gt_left, gt_right,
                           cost_class=1.0, cost_span=1.0):
    bs, nq, _ = pred_logits.shape
    out_prob = jax.nn.softmax(pred_logits.reshape(bs * nq, -1), axis=-1)
    el = pred_left.reshape(bs * nq, -1)
    er = pred_right.reshape(bs * nq, -1)
    cc = -out_prob[:, gt_ids]
    cs = -(el[:, gt_left] + er[:, gt_right])
    return (cost_span * cs + cost_class * cc).reshape(bs, nq, -1)


if __name__ == "__main__":
    key = jax.random.PRNGKey(0)
    bs, num_queries, num_classes, seq_len = 2, 8, 32, 16
    sizes = [3, 5]
    T = sum(sizes)

    k1, k2, k3, k4, k5, k6 = jax.random.split(key, 6)
    outputs = {
        "pred_logits": jax.random.normal(k1, (bs, num_queries, num_classes), jnp.float32),
        "pred_left":   jax.random.normal(k2, (bs, num_queries, seq_len), jnp.float32),
        "pred_right":  jax.random.normal(k3, (bs, num_queries, seq_len), jnp.float32),
    }
    targets = {
        "labels":   jax.random.randint(k4, (T,), 0, num_classes, jnp.int32),
        "gt_left":  jax.random.randint(k5, (T,), 0, seq_len, jnp.int32),
        "gt_right": jax.random.randint(k6, (T,), 0, seq_len, jnp.int32),
        "sizes": sizes,
    }

    C, indices = hungarian_matcher_forward(outputs, targets)
    C = jax.block_until_ready(C)

    C_ref = _reference_cost_matrix(outputs["pred_logits"], outputs["pred_left"],
                                   outputs["pred_right"], targets["labels"],
                                   targets["gt_left"], targets["gt_right"])
    np.testing.assert_allclose(np.asarray(C), np.asarray(C_ref),
                               rtol=1e-5, atol=1e-5)

    # matching validity: 1-to-1, correct length, rows sorted
    for b, (i, j) in enumerate(indices):
        n_match = min(num_queries, sizes[b])
        assert len(i) == len(j) == n_match
        assert len(set(np.asarray(i).tolist())) == n_match
        assert len(set(np.asarray(j).tolist())) == n_match
        assert np.all(np.diff(np.asarray(i)) >= 0)

    print("KERNEL_OK")
</pallas_src>

<mosaic_0001>
module attributes {stable_mosaic.version = 11 : i64} {
  func.func @_cost_kernel(%arg0: i32, %arg1: memref<8x32xf32, #tpu.memory_space<vmem>>, %arg2: memref<8x16xf32, #tpu.memory_space<vmem>>, %arg3: memref<8x16xf32, #tpu.memory_space<vmem>>, %arg4: memref<32x128xf32, #tpu.memory_space<vmem>>, %arg5: memref<16x128xf32, #tpu.memory_space<vmem>>, %arg6: memref<16x128xf32, #tpu.memory_space<vmem>>, %arg7: memref<8x128xf32, #tpu.memory_space<vmem>>) attributes {dimension_semantics = [#tpu.dimension_semantics<parallel>], iteration_bounds = array<i64: 2>, scalar_prefetch = 0 : i64, scratch_operands = 0 : i64, tpu.core_type = #tpu.core_type<tc>, window_params = [{transform_indices = @transform_0, window_bounds = array<i64: 8, 32>}, {transform_indices = @transform_1, window_bounds = array<i64: 8, 16>}, {transform_indices = @transform_2, window_bounds = array<i64: 8, 16>}, {pipeline_mode = #tpu.pipeline_mode<synchronous>, transform_indices = @transform_3, window_bounds = array<i64: 32, 128>}, {pipeline_mode = #tpu.pipeline_mode<synchronous>, transform_indices = @transform_4, window_bounds = array<i64: 16, 128>}, {pipeline_mode = #tpu.pipeline_mode<synchronous>, transform_indices = @transform_5, window_bounds = array<i64: 16, 128>}, {transform_indices = @transform_6, window_bounds = array<i64: 8, 128>}]} {
    %c0 = arith.constant 0 : index
    %c0_0 = arith.constant 0 : index
    %0 = vector.load %arg1[%c0, %c0_0] : memref<8x32xf32, #tpu.memory_space<vmem>>, vector<8x32xf32>
    %cst = arith.constant dense<0xFF800000> : vector<8xf32>
    %1 = vector.multi_reduction <maximumf>, %0, %cst [1] : vector<8x32xf32> to vector<8xf32>
    %2 = vector.shape_cast %1 : vector<8xf32> to vector<8x1xf32>
    %3 = vector.broadcast %2 : vector<8x1xf32> to vector<8x32xf32>
    %4 = arith.subf %0, %3 : vector<8x32xf32>
    %5 = math.exp %4 : vector<8x32xf32>
    %cst_1 = arith.constant dense<0.000000e+00> : vector<8xf32>
    %6 = vector.multi_reduction <add>, %5, %cst_1 [1] : vector<8x32xf32> to vector<8xf32>
    %7 = vector.shape_cast %6 : vector<8xf32> to vector<8x1xf32>
    %c0_2 = arith.constant 0 : index
    %c0_3 = arith.constant 0 : index
    %8 = vector.load %arg4[%c0_2, %c0_3] : memref<32x128xf32, #tpu.memory_space<vmem>>, vector<32x128xf32>
    %cst_4 = arith.constant dense<0.000000e+00> : vector<8x128xf32>
    %9 = tpu.matmul %5, %8, %cst_4 {dimension_numbers = #tpu.dot_dimension_numbers<[1], [0], [0], [1], [0, 0, 1, 1], [], []>} : vector<8x32xf32>, vector<32x128xf32>, vector<8x128xf32> -> vector<8x128xf32>
    %c0_5 = arith.constant 0 : index
    %c0_6 = arith.constant 0 : index
    %10 = vector.load %arg2[%c0_5, %c0_6] : memref<8x16xf32, #tpu.memory_space<vmem>>, vector<8x16xf32>
    %c0_7 = arith.constant 0 : index
    %c0_8 = arith.constant 0 : index
    %11 = vector.load %arg5[%c0_7, %c0_8] : memref<16x128xf32, #tpu.memory_space<vmem>>, vector<16x128xf32>
    %cst_9 = arith.constant dense<0.000000e+00> : vector<8x128xf32>
    %12 = tpu.matmul %10, %11, %cst_9 {dimension_numbers = #tpu.dot_dimension_numbers<[1], [0], [0], [1], [0, 0, 1, 1], [], []>} : vector<8x16xf32>, vector<16x128xf32>, vector<8x128xf32> -> vector<8x128xf32>
    %c0_10 = arith.constant 0 : index
    %c0_11 = arith.constant 0 : index
    %13 = vector.load %arg3[%c0_10, %c0_11] : memref<8x16xf32, #tpu.memory_space<vmem>>, vector<8x16xf32>
    %c0_12 = arith.constant 0 : index
    %c0_13 = arith.constant 0 : index
    %14 = vector.load %arg6[%c0_12, %c0_13] : memref<16x128xf32, #tpu.memory_space<vmem>>, vector<16x128xf32>
    %cst_14 = arith.constant dense<0.000000e+00> : vector<8x128xf32>
    %15 = tpu.matmul %13, %14, %cst_14 {dimension_numbers = #tpu.dot_dimension_numbers<[1], [0], [0], [1], [0, 0, 1, 1], [], []>} : vector<8x16xf32>, vector<16x128xf32>, vector<8x128xf32> -> vector<8x128xf32>
    %16 = arith.addf %12, %15 : vector<8x128xf32>
    %17 = tpu.reciprocal %7 : vector<8x1xf32> -> vector<8x1xf32>
    %18 = vector.broadcast %17 : vector<8x1xf32> to vector<8x128xf32>
    %19 = arith.mulf %9, %18 : vector<8x128xf32>
    %20 = arith.addf %19, %16 : vector<8x128xf32>
    %c0_15 = arith.constant 0 : index
    %c0_16 = arith.constant 0 : index
    %21 = vector.load %arg7[%c0_15, %c0_16] : memref<8x128xf32, #tpu.memory_space<vmem>>, vector<8x128xf32>
    tpu.vector_store %arg7[%c0_15, %c0_16], %20 {strides = array<i32>} : memref<8x128xf32, #tpu.memory_space<vmem>>, vector<8x128xf32>,
    return
  }
  func.func @transform_0(%arg0: i32) -> (i32, i32) {
    %c0_i32 = arith.constant 0 : i32
    %c0_i32_0 = arith.constant 0 : i32
    return %arg0, %c0_i32 : i32, i32
  }
  func.func @transform_1(%arg0: i32) -> (i32, i32) {
    %c0_i32 = arith.constant 0 : i32
    %c0_i32_0 = arith.constant 0 : i32
    return %arg0, %c0_i32 : i32, i32
  }
  func.func @transform_2(%arg0: i32) -> (i32, i32) {
    %c0_i32 = arith.constant 0 : i32
    %c0_i32_0 = arith.constant 0 : i32
    return %arg0, %c0_i32 : i32, i32
  }
  func.func @transform_3(%arg0: i32) -> (i32, i32) {
    %c0_i32 = arith.constant 0 : i32
    %c0_i32_0 = arith.constant 0 : i32
    %c0_i32_1 = arith.constant 0 : i32
    return %c0_i32, %c0_i32_0 : i32, i32
  }
  func.func @transform_4(%arg0: i32) -> (i32, i32) {
    %c0_i32 = arith.constant 0 : i32
    %c0_i32_0 = arith.constant 0 : i32
    %c0_i32_1 = arith.constant 0 : i32
    return %c0_i32, %c0_i32_0 : i32, i32
  }
  func.func @transform_5(%arg0: i32) -> (i32, i32) {
    %c0_i32 = arith.constant 0 : i32
    %c0_i32_0 = arith.constant 0 : i32
    %c0_i32_1 = arith.constant 0 : i32
    return %c0_i32, %c0_i32_0 : i32, i32
  }
  func.func @transform_6(%arg0: i32) -> (i32, i32) {
    %c0_i32 = arith.constant 0 : i32
    %c0_i32_0 = arith.constant 0 : i32
    return %arg0, %c0_i32 : i32, i32
  }
}

module attributes {stable_mosaic.version = 11 : i64} {
  func.func @_cost_kernel(%arg0: i32, %arg1: memref<8x32xf32, #tpu.memory_space<vmem>>, %arg2: memref<8x16xf32, #tpu.memory_space<vmem>>, %arg3: memref<8x16xf32, #tpu.memory_space<vmem>>, %arg4: memref<32x128xf32, #tpu.memory_space<vmem>>, %arg5: memref<16x128xf32, #tpu.memory_space<vmem>>, %arg6: memref<16x128xf32, #tpu.memory_space<vmem>>, %arg7: memref<8x128xf32, #tpu.memory_space<vmem>>) attributes {dimension_semantics = [#tpu.dimension_semantics<parallel>], iteration_bounds = array<i64: 2>, scalar_prefetch = 0 : i64, scratch_operands = 0 : i64, tpu.core_type = #tpu.core_type<tc>, window_params = [{transform_indices = @transform_0, window_bounds = array<i64: 8, 32>}, {transform_indices = @transform_1, window_bounds = array<i64: 8, 16>}, {transform_indices = @transform_2, window_bounds = array<i64: 8, 16>}, {pipeline_mode = #tpu.pipeline_mode<synchronous>, transform_indices = @transform_3, window_bounds = array<i64: 32, 128>}, {pipeline_mode = #tpu.pipeline_mode<synchronous>, transform_indices = @transform_4, window_bounds = array<i64: 16, 128>}, {pipeline_mode = #tpu.pipeline_mode<synchronous>, transform_indices = @transform_5, window_bounds = array<i64: 16, 128>}, {transform_indices = @transform_6, window_bounds = array<i64: 8, 128>}]} {
    %c0 = arith.constant 0 : index
    %c0_0 = arith.constant 0 : index
    %0 = vector.load %arg1[%c0, %c0_0] : memref<8x32xf32, #tpu.memory_space<vmem>>, vector<8x32xf32>
    %cst = arith.constant dense<0xFF800000> : vector<8xf32>
    %1 = vector.multi_reduction <maximumf>, %0, %cst [1] : vector<8x32xf32> to vector<8xf32>
    %2 = vector.shape_cast %1 : vector<8xf32> to vector<8x1xf32>
    %3 = vector.broadcast %2 : vector<8x1xf32> to vector<8x32xf32>
    %4 = arith.subf %0, %3 : vector<8x32xf32>
    %5 = math.exp %4 : vector<8x32xf32>
    %cst_1 = arith.constant dense<0.000000e+00> : vector<8xf32>
    %6 = vector.multi_reduction <add>, %5, %cst_1 [1] : vector<8x32xf32> to vector<8xf32>
    %7 = vector.shape_cast %6 : vector<8xf32> to vector<8x1xf32>
    %c0_2 = arith.constant 0 : index
    %c0_3 = arith.constant 0 : index
    %8 = vector.load %arg4[%c0_2, %c0_3] : memref<32x128xf32, #tpu.memory_space<vmem>>, vector<32x128xf32>
    %cst_4 = arith.constant dense<0.000000e+00> : vector<8x128xf32>
    %9 = tpu.matmul %5, %8, %cst_4 {dimension_numbers = #tpu.dot_dimension_numbers<[1], [0], [0], [1], [0, 0, 1, 1], [], []>} : vector<8x32xf32>, vector<32x128xf32>, vector<8x128xf32> -> vector<8x128xf32>
    %c0_5 = arith.constant 0 : index
    %c0_6 = arith.constant 0 : index
    %10 = vector.load %arg2[%c0_5, %c0_6] : memref<8x16xf32, #tpu.memory_space<vmem>>, vector<8x16xf32>
    %c0_7 = arith.constant 0 : index
    %c0_8 = arith.constant 0 : index
    %11 = vector.load %arg5[%c0_7, %c0_8] : memref<16x128xf32, #tpu.memory_space<vmem>>, vector<16x128xf32>
    %cst_9 = arith.constant dense<0.000000e+00> : vector<8x128xf32>
    %12 = tpu.matmul %10, %11, %cst_9 {dimension_numbers = #tpu.dot_dimension_numbers<[1], [0], [0], [1], [0, 0, 1, 1], [], []>} : vector<8x16xf32>, vector<16x128xf32>, vector<8x128xf32> -> vector<8x128xf32>
    %c0_10 = arith.constant 0 : index
    %c0_11 = arith.constant 0 : index
    %13 = vector.load %arg3[%c0_10, %c0_11] : memref<8x16xf32, #tpu.memory_space<vmem>>, vector<8x16xf32>
    %c0_12 = arith.constant 0 : index
    %c0_13 = arith.constant 0 : index
    %14 = vector.load %arg6[%c0_12, %c0_13] : memref<16x128xf32, #tpu.memory_space<vmem>>, vector<16x128xf32>
    %cst_14 = arith.constant dense<0.000000e+00> : vector<8x128xf32>
    %15 = tpu.matmul %13, %14, %cst_14 {dimension_numbers = #tpu.dot_dimension_numbers<[1], [0], [0], [1], [0, 0, 1, 1], [], []>} : vector<8x16xf32>, vector<16x128xf32>, vector<8x128xf32> -> vector<8x128xf32>
    %16 = arith.addf %12, %15 : vector<8x128xf32>
    %17 = tpu.reciprocal %7 : vector<8x1xf32> -> vector<8x1xf32>
    %18 = vector.broadcast %17 : vector<8x1xf32> to vector<8x128xf32>
    %19 = arith.mulf %9, %18 : vector<8x128xf32>
    %20 = arith.addf %19, %16 : vector<8x128xf32>
    %c0_15 = arith.constant 0 : index
    %c0_16 = arith.constant 0 : index
    %21 = vector.load %arg7[%c0_15, %c0_16] : memref<8x128xf32, #tpu.memory_space<vmem>>, vector<8x128xf32>
    tpu.vector_store %arg7[%c0_15, %c0_16], %20 {strides = array<i32>} : memref<8x128xf32, #tpu.memory_space<vmem>>, vector<8x128xf32>,
    return
  }
  func.func @transform_0(%arg0: i32) -> (i32, i32) {
    %c0_i32 = arith.constant 0 : i32
    %c0_i32_0 = arith.constant 0 : i32
    return %arg0, %c0_i32 : i32, i32
  }
  func.func @transform_1(%arg0: i32) -> (i32, i32) {
    %c0_i32 = arith.constant 0 : i32
    %c0_i32_0 = arith.constant 0 : i32
    return %arg0, %c0_i32 : i32, i32
  }
  func.func @transform_2(%arg0: i32) -> (i32, i32) {
    %c0_i32 = arith.constant 0 : i32
    %c0_i32_0 = arith.constant 0 : i32
    return %arg0, %c0_i32 : i32, i32
  }
  func.func @transform_3(%arg0: i32) -> (i32, i32) {
    %c0_i32 = arith.constant 0 : i32
    %c0_i32_0 = arith.constant 0 : i32
    %c0_i32_1 = arith.constant 0 : i32
    return %c0_i32, %c0_i32_0 : i32, i32
  }
  func.func @transform_4(%arg0: i32) -> (i32, i32) {
    %c0_i32 = arith.constant 0 : i32
    %c0_i32_0 = arith.constant 0 : i32
    %c0_i32_1 = arith.constant 0 : i32
    return %c0_i32, %c0_i32_0 : i32, i32
  }
  func.func @transform_5(%arg0: i32) -> (i32, i32) {
    %c0_i32 = arith.constant 0 : i32
    %c0_i32_0 = arith.constant 0 : i32
    %c0_i32_1 = arith.constant 0 : i32
    return %c0_i32, %c0_i32_0 : i32, i32
  }
  func.func @transform_6(%arg0: i32) -> (i32, i32) {
    %c0_i32 = arith.constant 0 : i32
    %c0_i32_0 = arith.constant 0 : i32
    return %arg0, %c0_i32 : i32, i32
  }
}

</mosaic_0001>

<llo_original>
// kernel: tpu_custom_call.1
$region0: #{tpu_custom_call.1}
  #allocation0 [shape = 'u32[]', space=smem, size = 0x4, offset = 0x4, fixed_abs, tag = 'smem constant byte address 0x4 - core index']
  #allocation1 [shape = 'u32[72,128]{1,0:T(1,128)}', space=vmem, size = 0x9000, scoped, tag = 'internal scratch']
  %s0 = inlined_call_operand.hbm [shape: f32[16,32], index: 0, kind: input, shape index: {}]
  %s1 = inlined_call_operand.hbm [shape: f32[16,16], index: 1, kind: input, shape index: {}]
  %s2 = inlined_call_operand.hbm [shape: f32[16,16], index: 2, kind: input, shape index: {}]
  %s3 = inlined_call_operand.hbm [shape: f32[32,128], index: 3, kind: input, shape index: {}]
  %s4 = inlined_call_operand.hbm [shape: f32[16,128], index: 4, kind: input, shape index: {}]
  %s5 = inlined_call_operand.hbm [shape: f32[16,128], index: 5, kind: input, shape index: {}]
  %s6 = inlined_call_operand.hbm [shape: f32[16,128], index: 6, kind: output, shape index: {}]
  %s7 = sld [smem:[#allocation0]]
  $region81: #{tpu_custom_call.1} parent=0
    _
  %s9 = ssub.s32 1, %s7
  %s10 = scalar_select 0, %s9, %s7
  $region1: #{tpu_custom_call.1} parent=0
    #allocation2 [shape = 'u8[8192]{0}', space=vmem, size = 0x2000, scoped, tag = 'input window, operand 0']
    #allocation3 [shape = 's32[2]{0}', space=sflag, size = 0x8, scoped, tag = 'scoped memory for tpu_custom_call.1']
    #allocation4 [shape = 's32[2]{0}', space=sflag, size = 0x8, scoped, tag = 'scoped memory for tpu_custom_call.1']
    #allocation5 [shape = 'u8[8192]{0}', space=vmem, size = 0x2000, scoped, tag = 'input window, operand 1']
    #allocation6 [shape = 's32[2]{0}', space=sflag, size = 0x8, scoped, tag = 'scoped memory for tpu_custom_call.1']
    #allocation7 [shape = 'u8[8192]{0}', space=vmem, size = 0x2000, scoped, tag = 'input window, operand 2']
    #allocation8 [shape = 'u8[16384]{0}', space=vmem, size = 0x4000, scoped, tag = 'input window, operand 3, single buffered']
    #allocation9 [shape = 's32[1]{0}', space=sflag, size = 0x4, scoped, tag = 'scoped memory for tpu_custom_call.1']
    #allocation10 [shape = 'u8[8192]{0}', space=vmem, size = 0x2000, scoped, tag = 'input window, operand 4, single buffered']
    #allocation11 [shape = 'u8[8192]{0}', space=vmem, size = 0x2000, scoped, tag = 'input window, operand 5, single buffered']
    #allocation12 [shape = 's32[1]{0}', space=sflag, size = 0x4, scoped, tag = 'scoped memory for tpu_custom_call.1']
    #allocation13 [shape = 'u8[8192]{0}', space=vmem, size = 0x2000, scoped, tag = 'output window, operand 0']
    %11 = vsyncpa [#allocation3], 0
    %s12 = scalar_lea.sflag [#allocation3], 1
    %13 = vsyncpa %s12, 0
    %14 = vsyncpa [#allocation6], 0
    %s15 = scalar_lea.sflag [#allocation6], 1
    %16 = vsyncpa %s15, 0
    %17 = vsyncpa [#allocation9], 0
    %18 = vsyncpa [#allocation12], 0
    %19 = vsyncpa [#allocation4], 0
    %s20 = scalar_lea.sflag [#allocation4], 1
    %21 = vsyncpa %s20, 0
    loop: start=0, step=1, limit=4
    $region2: #{tpu_custom_call.1} parent=1 // loop_pre_header
      _
    $region3: #{tpu_custom_call.1} parent=1 // loop_header
      %s23 = sphi 0, %s27
      %p24 = scmp.ge.s32.totalorder %s23, 4
      %s33 = sphi 0, %s35
      %s36 = sphi 0, %s33
      %s37 = sphi 0, %s36
      %s53 = sphi 0, %s37
      %s59 = sphi 0, %s61
      %s62 = sphi 0, %s59
      %s63 = sphi 0, %s62
      %s79 = sphi 0, %s63
      %s85 = sphi 0, %s87
      %s88 = sphi 0, %s85
      %s89 = sphi 0, %s88
      %s105 = sphi 0, %s89
      %s109 = sphi 0, %s109
      %s111 = sphi 0, %s109
      %s112 = sphi 0, %s111
      %s126 = sphi 0, %s112
      %s130 = sphi 0, %s130
      %s132 = sphi 0, %s130
      %s133 = sphi 0, %s132
      %s147 = sphi 0, %s133
      %s151 = sphi 0, %s151
      %s153 = sphi 0, %s151
      %s154 = sphi 0, %s153
      %s168 = sphi 0, %s154
      %s174 = sphi 0, %s176
      %s177 = sphi 0, %s174
      %s178 = sphi 0, %s177
      %s194 = sphi 0, %s178
    $region4: #{tpu_custom_call.1} parent=1 // loop_header_branch
      %26 = sbr.rel (%p24) target = $region8
    $region5: #{tpu_custom_call.1} parent=1 // loop_body
      %s28 = ssub.s32 %s23, 1
      %s29 = ssub.s32 %s23, 2
      %s30 = sadd.s32 %s23, 1
      %s31 = ssub.s32 %s23, %s30
      %p32 = scmp.eq.s32.totalorder %s31, 0
      %s34 = sadd.s32 %s33, 1
      %s35 = scalar_select %p32, %s33, %s34
      %p38 = pneg %p32
      %p39 = scmp.eq.s32.totalorder %s23, 1
      %p40 = por %p38, %p39
      %p41 = scmp.ne.s32.totalorder %s33, %s36
      %p42 = scmp.eq.s32.totalorder %s23, 0
      %p43 = por %p41, %p42
      %p44 = scmp.ne.s32.totalorder %s33, %s36
      %p45 = scmp.eq.s32.totalorder %s28, 1
      %p46 = por %p44, %p45
      %p47 = scmp.ne.s32.totalorder %s36, %s37
      %p48 = scmp.eq.s32.totalorder %s28, 0
      %p49 = por %p47, %p48
      %p50 = scmp.ne.s32.totalorder %s36, %s37
      %p51 = scmp.eq.s32.totalorder %s29, 1
      %p52 = por %p50, %p51
      %p54 = scmp.ne.s32.totalorder %s37, %s53
      %p55 = scmp.eq.s32.totalorder %s29, 0
      %p56 = por %p54, %p55
      %s57 = ssub.s32 %s23, %s30
      %p58 = scmp.eq.s32.totalorder %s57, 0
      %s60 = sadd.s32 %s59, 1
      %s61 = scalar_select %p58, %s59, %s60
      %p64 = pneg %p58
      %p65 = scmp.eq.s32.totalorder %s23, 1
      %p66 = por %p64, %p65
      %p67 = scmp.ne.s32.totalorder %s59, %s62
      %p68 = scmp.eq.s32.totalorder %s23, 0
      %p69 = por %p67, %p68
      %p70 = scmp.ne.s32.totalorder %s59, %s62
      %p71 = scmp.eq.s32.totalorder %s28, 1
      %p72 = por %p70, %p71
      %p73 = scmp.ne.s32.totalorder %s62, %s63
      %p74 = scmp.eq.s32.totalorder %s28, 0
      %p75 = por %p73, %p74
      %p76 = scmp.ne.s32.totalorder %s62, %s63
      %p77 = scmp.eq.s32.totalorder %s29, 1
      %p78 = por %p76, %p77
      %p80 = scmp.ne.s32.totalorder %s63, %s79
      %p81 = scmp.eq.s32.totalorder %s29, 0
      %p82 = por %p80, %p81
      %s83 = ssub.s32 %s23, %s30
      %p84 = scmp.eq.s32.totalorder %s83, 0
      %s86 = sadd.s32 %s85, 1
      %s87 = scalar_select %p84, %s85, %s86
      %p90 = pneg %p84
      %p91 = scmp.eq.s32.totalorder %s23, 1
      %p92 = por %p90, %p91
      %p93 = scmp.ne.s32.totalorder %s85, %s88
      %p94 = scmp.eq.s32.totalorder %s23, 0
      %p95 = por %p93, %p94
      %p96 = scmp.ne.s32.totalorder %s85, %s88
      %p97 = scmp.eq.s32.totalorder %s28, 1
      %p98 = por %p96, %p97
      %p99 = scmp.ne.s32.totalorder %s88, %s89
      %p100 = scmp.eq.s32.totalorder %s28, 0
      %p101 = por %p99, %p100
      %p102 = scmp.ne.s32.totalorder %s88, %s89
      %p103 = scmp.eq.s32.totalorder %s29, 1
      %p104 = por %p102, %p103
      %p106 = scmp.ne.s32.totalorder %s89, %s105
      %p107 = scmp.eq.s32.totalorder %s29, 0
      %p108 = por %p106, %p107
      %s110 = sadd.s32 %s109, 1
      %p113 = scmp.eq.s32.totalorder %s23, 1
      %p114 = scmp.ne.s32.totalorder %s109, %s111
      %p115 = scmp.eq.s32.totalorder %s23, 0
      %p116 = por %p114, %p115
      %p117 = scmp.ne.s32.totalorder %s109, %s111
      %p118 = scmp.eq.s32.totalorder %s28, 1
      %p119 = por %p117, %p118
      %p120 = scmp.ne.s32.totalorder %s111, %s112
      %p121 = scmp.eq.s32.totalorder %s28, 0
      %p122 = por %p120, %p121
      %p123 = scmp.ne.s32.totalorder %s111, %s112
      %p124 = scmp.eq.s32.totalorder %s29, 1
      %p125 = por %p123, %p124
      %p127 = scmp.ne.s32.totalorder %s112, %s126
      %p128 = scmp.eq.s32.totalorder %s29, 0
      %p129 = por %p127, %p128
      %s131 = sadd.s32 %s130, 1
      %p134 = scmp.eq.s32.totalorder %s23, 1
      %p135 = scmp.ne.s32.totalorder %s130, %s132
      %p136 = scmp.eq.s32.totalorder %s23, 0
      %p137 = por %p135, %p136
      %p138 = scmp.ne.s32.totalorder %s130, %s132
      %p139 = scmp.eq.s32.totalorder %s28, 1
      %p140 = por %p138, %p139
      %p141 = scmp.ne.s32.totalorder %s132, %s133
      %p142 = scmp.eq.s32.totalorder %s28, 0
      %p143 = por %p141, %p142
      %p144 = scmp.ne.s32.totalorder %s132, %s133
      %p145 = scmp.eq.s32.totalorder %s29, 1
      %p146 = por %p144, %p145
      %p148 = scmp.ne.s32.totalorder %s133, %s147
      %p149 = scmp.eq.s32.totalorder %s29, 0
      %p150 = por %p148, %p149
      %s152 = sadd.s32 %s151, 1
      %p155 = scmp.eq.s32.totalorder %s23, 1
      %p156 = scmp.ne.s32.totalorder %s151, %s153
      %p157 = scmp.eq.s32.totalorder %s23, 0
      %p158 = por %p156, %p157
      %p159 = scmp.ne.s32.totalorder %s151, %s153
      %p160 = scmp.eq.s32.totalorder %s28, 1
      %p161 = por %p159, %p160
      %p162 = scmp.ne.s32.totalorder %s153, %s154
      %p163 = scmp.eq.s32.totalorder %s28, 0
      %p164 = por %p162, %p163
      %p165 = scmp.ne.s32.totalorder %s153, %s154
      %p166 = scmp.eq.s32.totalorder %s29, 1
      %p167 = por %p165, %p166
      %p169 = scmp.ne.s32.totalorder %s154, %s168
      %p170 = scmp.eq.s32.totalorder %s29, 0
      %p171 = por %p169, %p170
      %s172 = ssub.s32 %s23, %s30
      %p173 = scmp.eq.s32.totalorder %s172, 0
      %s175 = sadd.s32 %s174, 1
      %s176 = scalar_select %p173, %s174, %s175
      %p179 = pneg %p173
      %p180 = scmp.eq.s32.totalorder %s23, 1
      %p181 = por %p179, %p180
      %p182 = scmp.ne.s32.totalorder %s174, %s177
      %p183 = scmp.eq.s32.totalorder %s23, 0
      %p184 = por %p182, %p183
      %p185 = scmp.ne.s32.totalorder %s174, %s177
      %p186 = scmp.eq.s32.totalorder %s28, 1
      %p187 = por %p185, %p186
      %p188 = scmp.ne.s32.totalorder %s177, %s178
      %p189 = scmp.eq.s32.totalorder %s28, 0
      %p190 = por %p188, %p189
      %p191 = scmp.ne.s32.totalorder %s177, %s178
      %p192 = scmp.eq.s32.totalorder %s29, 1
      %p193 = por %p191, %p192
      %p195 = scmp.ne.s32.totalorder %s178, %s194
      %p196 = scmp.eq.s32.totalorder %s29, 0
      %p197 = por %p195, %p196
      %p198 = scmp.le.s32.totalorder 1, %s23
      %p199 = scmp.lt.s32.totalorder %s23, 3
      %p200 = pnand %p198, %p199
      %p201 = pneg %p200
      // Predicated region
      $region9: #{tpu_custom_call.1} parent=5 // pred_check
        _
      $region10: #{tpu_custom_call.1} parent=5 // pred_check_branch
        %203 = sbr.rel (%p200) target = $region12
      $region11: #{tpu_custom_call.1} parent=5 // pred_region
        %s204 = ssub.s32 %s23, 1
        // Predicated region
        $region13: #{tpu_custom_call.1} parent=11 // pred_check
          %p205 = pneg %p122
        $region14: #{tpu_custom_call.1} parent=11 // pred_check_branch
          %207 = sbr.rel (%p205) target = $region16
        $region15: #{tpu_custom_call.1} parent=11 // pred_region
          %209 = vsyncadd [#allocation9], 0
          %s210 = sshll.u32 %s3, 4
          %s211 = int_to_ptr.hbm [resolvable:$true] %s210
          %s212 = sshll.u32 [#allocation8], 4
          %s213 = int_to_ptr.vmem [resolvable:$true] %s212
          %218 = dma.hbm_to_vmem [thread:$0]  %s211, 512, %s213, [#allocation9], 128, 128, 8
        $region16: #{tpu_custom_call.1} parent=11 // pred_fallthru
          _
        // Predicated region
        $region17: #{tpu_custom_call.1} parent=11 // pred_check
          %p219 = pneg %p143
        $region18: #{tpu_custom_call.1} parent=11 // pred_check_branch
          %221 = sbr.rel (%p219) target = $region20
        $region19: #{tpu_custom_call.1} parent=11 // pred_region
          %223 = vsyncadd [#allocation9], 0
          %s224 = sshll.u32 %s4, 4
          %s225 = int_to_ptr.hbm [resolvable:$true] %s224
          %s226 = sshll.u32 [#allocation10], 4
          %s227 = int_to_ptr.vmem [resolvable:$true] %s226
          %232 = dma.hbm_to_vmem [thread:$0]  %s225, 256, %s227, [#allocation9], 128, 128, 8
        $region20: #{tpu_custom_call.1} parent=11 // pred_fallthru
          _
        // Predicated region
        $region21: #{tpu_custom_call.1} parent=11 // pred_check
          %p233 = pneg %p164
        $region22: #{tpu_custom_call.1} parent=11 // pred_check_branch
          %235 = sbr.rel (%p233) target = $region24
        $region23: #{tpu_custom_call.1} parent=11 // pred_region
          %237 = vsyncadd [#allocation12], 0
          %s238 = sshll.u32 %s5, 4
          %s239 = int_to_ptr.hbm [resolvable:$true] %s238
          %s240 = sshll.u32 [#allocation11], 4
          %s241 = int_to_ptr.vmem [resolvable:$true] %s240
          %246 = dma.hbm_to_vmem [thread:$0]  %s239, 256, %s241, [#allocation12], 128, 128, 8
        $region24: #{tpu_custom_call.1} parent=11 // pred_fallthru
          _
      $region12: #{tpu_custom_call.1} parent=5 // pred_fallthru
        _
      %p247 = scmp.lt.s32.totalorder %s23, 2
      // Predicated region
      $region25: #{tpu_custom_call.1} parent=5 // pred_check
        %p248 = pneg %p247
      $region26: #{tpu_custom_call.1} parent=5 // pred_check_branch
        %250 = sbr.rel (%p248) target = $region28
      $region27: #{tpu_custom_call.1} parent=5 // pred_region
        // Predicated region
        $region29: #{tpu_custom_call.1} parent=27 // pred_check
          %p251 = pneg %p43
        $region30: #{tpu_custom_call.1} parent=27 // pred_check_branch
          %253 = sbr.rel (%p251) target = $region32
        $region31: #{tpu_custom_call.1} parent=27 // pred_region
          %s254 = sand.u32 %s33, 1
          %s255 = scalar_lea.sflag [#allocation3], %s254
          %s256 = sand.u32 %s33, 1
          %s257 = smul.addr %s256, 8
          %s258 = scalar_lea.vmem [#allocation2], %s257
          %260 = vsyncadd %s255, 0
          %s261 = smul.addr %s23, 8
          %s262 = scalar_lea.hbm %s0, %s261
          %s264 = sshll.u32 %s262, 4
          %s265 = int_to_ptr.hbm [resolvable:$true] %s264
          %s266 = sshll.u32 %s258, 4
          %s267 = int_to_ptr.vmem [resolvable:$true] %s266
          %269 = dma.hbm_to_vmem [thread:$0]  %s265, 128, %s267, %s255
        $region32: #{tpu_custom_call.1} parent=27 // pred_fallthru
          _
        // Predicated region
        $region33: #{tpu_custom_call.1} parent=27 // pred_check
          %p270 = pneg %p69
        $region34: #{tpu_custom_call.1} parent=27 // pred_check_branch
          %272 = sbr.rel (%p270) target = $region36
        $region35: #{tpu_custom_call.1} parent=27 // pred_region
          %s273 = sand.u32 %s23, 1
          %s274 = scalar_lea.sflag [#allocation6], %s273
          %s275 = sand.u32 %s59, 1
          %s276 = smul.addr %s275, 8
          %s277 = scalar_lea.vmem [#allocation5], %s276
          %279 = vsyncadd %s274, 0
          %s280 = smul.addr %s23, 8
          %s281 = scalar_lea.hbm %s1, %s280
          %s283 = sshll.u32 %s281, 4
          %s284 = int_to_ptr.hbm [resolvable:$true] %s283
          %s285 = sshll.u32 %s277, 4
          %s286 = int_to_ptr.vmem [resolvable:$true] %s285
          %288 = dma.hbm_to_vmem [thread:$0]  %s284, 128, %s286, %s274
        $region36: #{tpu_custom_call.1} parent=27 // pred_fallthru
          _
        // Predicated region
        $region37: #{tpu_custom_call.1} parent=27 // pred_check
          %p289 = pneg %p95
        $region38: #{tpu_custom_call.1} parent=27 // pred_check_branch
          %291 = sbr.rel (%p289) target = $region40
        $region39: #{tpu_custom_call.1} parent=27 // pred_region
          %s292 = sand.u32 %s23, 1
          %s293 = scalar_lea.sflag [#allocation6], %s292
          %s294 = sand.u32 %s85, 1
          %s295 = smul.addr %s294, 8
          %s296 = scalar_lea.vmem [#allocation7], %s295
          %298 = vsyncadd %s293, 0
          %s299 = smul.addr %s23, 8
          %s300 = scalar_lea.hbm %s2, %s299
          %s302 = sshll.u32 %s300, 4
          %s303 = int_to_ptr.hbm [resolvable:$true] %s302
          %s304 = sshll.u32 %s296, 4
          %s305 = int_to_ptr.vmem [resolvable:$true] %s304
          %307 = dma.hbm_to_vmem [thread:$0]  %s303, 128, %s305, %s293
        $region40: #{tpu_custom_call.1} parent=27 // pred_fallthru
          _
      $region28: #{tpu_custom_call.1} parent=5 // pred_fallthru
        _
      %p308 = scmp.le.s32.totalorder 1, %s23
      %p309 = scmp.lt.s32.totalorder %s23, 3
      %p310 = pnand %p308, %p309
      %p311 = pneg %p310
      // Predicated region
      $region41: #{tpu_custom_call.1} parent=5 // pred_check
        _
      $region42: #{tpu_custom_call.1} parent=5 // pred_check_branch
        %313 = sbr.rel (%p310) target = $region44
      $region43: #{tpu_custom_call.1} parent=5 // pred_region
        %s314 = ssub.s32 %s23, 1
        %s315 = sand.u32 %s36, 1
        %s316 = scalar_lea.sflag [#allocation3], %s315
        %s317 = sand.u32 %s36, 1
        %s318 = smul.addr %s317, 8
        %s319 = scalar_lea.vmem [#allocation2], %s318
        // Predicated region
        $region45: #{tpu_custom_call.1} parent=43 // pred_check
          %p320 = pneg %p49
        $region46: #{tpu_custom_call.1} parent=43 // pred_check_branch
          %322 = sbr.rel (%p320) target = $region48
        $region47: #{tpu_custom_call.1} parent=43 // pred_region
          %324 = dma.done %s316, 128
        $region48: #{tpu_custom_call.1} parent=43 // pred_fallthru
          _
        %s325 = sand.u32 %s28, 1
        %s326 = scalar_lea.sflag [#allocation6], %s325
        %s327 = sand.u32 %s62, 1
        %s328 = smul.addr %s327, 8
        %s329 = scalar_lea.vmem [#allocation5], %s328
        // Predicated region
        $region49: #{tpu_custom_call.1} parent=43 // pred_check
          %p330 = pneg %p75
        $region50: #{tpu_custom_call.1} parent=43 // pred_check_branch
          %332 = sbr.rel (%p330) target = $region52
        $region51: #{tpu_custom_call.1} parent=43 // pred_region
          %334 = dma.done %s326, 128
        $region52: #{tpu_custom_call.1} parent=43 // pred_fallthru
          _
        %s335 = sand.u32 %s28, 1
        %s336 = scalar_lea.sflag [#allocation6], %s335
        %s337 = sand.u32 %s88, 1
        %s338 = smul.addr %s337, 8
        %s339 = scalar_lea.vmem [#allocation7], %s338
        // Predicated region
        $region53: #{tpu_custom_call.1} parent=43 // pred_check
          %p340 = pneg %p101
        $region54: #{tpu_custom_call.1} parent=43 // pred_check_branch
          %342 = sbr.rel (%p340) target = $region56
        $region55: #{tpu_custom_call.1} parent=43 // pred_region
          %344 = dma.done %s336, 128
        $region56: #{tpu_custom_call.1} parent=43 // pred_fallthru
          _
        // Predicated region
        $region57: #{tpu_custom_call.1} parent=43 // pred_check
          %p345 = pneg %p122
        $region58: #{tpu_custom_call.1} parent=43 // pred_check_branch
          %347 = sbr.rel (%p345) target = $region60
        $region59: #{tpu_custom_call.1} parent=43 // pred_region
          %349 = dma.done [#allocation9], 512
        $region60: #{tpu_custom_call.1} parent=43 // pred_fallthru
          _
        // Predicated region
        $region61: #{tpu_custom_call.1} parent=43 // pred_check
          %p350 = pneg %p143
        $region62: #{tpu_custom_call.1} parent=43 // pred_check_branch
          %352 = sbr.rel (%p350) target = $region64
        $region63: #{tpu_custom_call.1} parent=43 // pred_region
          %354 = dma.done [#allocation9], 256
        $region64: #{tpu_custom_call.1} parent=43 // pred_fallthru
          _
        // Predicated region
        $region65: #{tpu_custom_call.1} parent=43 // pred_check
          %p355 = pneg %p164
        $region66: #{tpu_custom_call.1} parent=43 // pred_check_branch
          %357 = sbr.rel (%p355) target = $region68
        $region67: #{tpu_custom_call.1} parent=43 // pred_region
          %359 = dma.done [#allocation12], 256
        $region68: #{tpu_custom_call.1} parent=43 // pred_fallthru
          _
        %s360 = sand.u32 %s36, 1
        %s361 = scalar_lea.sflag [#allocation3], %s360
        %s362 = sand.u32 %s36, 1
        %s363 = smul.addr %s362, 8
        %s364 = scalar_lea.vmem [#allocation2], %s363
        %p365 = pneg %p49
        %p366 = pneg %p46
        %s367 = sand.u32 %s28, 1
        %s368 = scalar_lea.sflag [#allocation6], %s367
        %s369 = sand.u32 %s62, 1
        %s370 = smul.addr %s369, 8
        %s371 = scalar_lea.vmem [#allocation5], %s370
        %p372 = pneg %p75
        %p373 = pneg %p72
        %s374 = sand.u32 %s28, 1
        %s375 = scalar_lea.sflag [#allocation6], %s374
        %s376 = sand.u32 %s88, 1
        %s377 = smul.addr %s376, 8
        %s378 = scalar_lea.vmem [#allocation7], %s377
        %p379 = pneg %p101
        %p380 = pneg %p98
        %p381 = pneg %p122
        %p382 = pneg %p119
        %p383 = pneg %p143
        %p384 = pneg %p140
        %p385 = pneg %p164
        %p386 = pneg %p161
        %p387 = pneg %p190
        %p388 = pneg %p187
        %s389 = sand.u32 %s177, 1
        %s390 = scalar_lea.sflag [#allocation4], %s389
        %s391 = sand.u32 %s177, 1
        %s392 = smul.addr %s391, 8
        %s393 = scalar_lea.vmem [#allocation13], %s392
        %v394 = vld [vmem:[%s319] sm:$0xff]
        %vm395 = vcmask 261120
        %v396 = vsel %vm395, %v394, -inf
        %397 = vmax.xlane.f32.xlu0 %v396
        %v398 = vpop.xlane.xlu0 %397
        %v399 = vsub.f32 %v394, %v398
        %v400 = vmul.f32 %v399, 1.442695
        %v401 = vpow.pop %v400
        %v402 = vsel %vm395, %v401, 0.0
        %403 = vadd.xlane.f32.xlu0 %v402
        %v404 = vpop.xlane.xlu0 %403
        %v405 = vld [vmem:[#allocation8] sm:$0xff]
        %v406 = vld [vmem:[#allocation8 + $0x8] sm:$0xff]
        %v407 = vld [vmem:[#allocation8 + $0x10] sm:$0xff]
        %v408 = vld [vmem:[#allocation8 + $0x18] sm:$0xff]
        %v410 = vsel %vm395, %v401, 0
        %412 = vmatpush.msra.mxu0 0.0
        %413 = vmatpush.msra.mxu0 0.0
        %414 = vmatpush.msra.mxu0 0.0
        %415 = vmatpush.msra.mxu0 0.0
        %416 = vmatpush.msra.mxu0 0.0
        %417 = vmatpush.msra.mxu0 0.0
        %418 = vmatpush.msra.mxu0 0.0
        %419 = vmatpush.msra.mxu0 0.0
        %420 = vmatpush.msra.mxu0 0.0
        %421 = vmatpush.msra.mxu0 0.0
        %422 = vmatpush.msra.mxu0 0.0
        %423 = vmatpush.msra.mxu0 0.0
        %424 = vmatpush.msra.mxu0 %v408
        %425 = vmatpush.msra.mxu0 %v407
        %426 = vmatpush.msra.mxu0 %v406
        %427 = vmatpush.msra.mxu0 %v405
        %428 = vmatmul.f32.gmra.mxu0 %v410
        %v429 = vpop.f32.mrf.mxu0
        %v430 = vadd.f32 0.0, %v429
        %431 = vdwg.mxu0
        %v432 = vld [vmem:[%s329] sm:$0xff]
        %v433 = vld [vmem:[#allocation10] sm:$0xff]
        %v434 = vld [vmem:[#allocation10 + $0x8] sm:$0xff]
        %v435 = vld [vmem:[%s339] sm:$0xff]
        %v436 = vld [vmem:[#allocation11] sm:$0xff]
        %v437 = vld [vmem:[#allocation11 + $0x8] sm:$0xff]
        %vm438 = vcmask 130048
        %v440 = vsel %vm438, %v435, 0
        %442 = vmatpush.msra.mxu0 0.0
        %443 = vmatpush.msra.mxu0 0.0
        %444 = vmatpush.msra.mxu0 0.0
        %445 = vmatpush.msra.mxu0 0.0
        %446 = vmatpush.msra.mxu0 0.0
        %447 = vmatpush.msra.mxu0 0.0
        %448 = vmatpush.msra.mxu0 0.0
        %449 = vmatpush.msra.mxu0 0.0
        %450 = vmatpush.msra.mxu0 0.0
        %451 = vmatpush.msra.mxu0 0.0
        %452 = vmatpush.msra.mxu0 0.0
        %453 = vmatpush.msra.mxu0 0.0
        %454 = vmatpush.msra.mxu0 0.0
        %455 = vmatpush.msra.mxu0 0.0
        %456 = vmatpush.msra.mxu0 %v437
        %457 = vmatpush.msra.mxu0 %v436
        %458 = vmatmul.f32.gmra.mxu0 %v440
        %v459 = vpop.f32.mrf.mxu0
        %v460 = vadd.f32 0.0, %v459
        %461 = vdwg.mxu0
        %v463 = vsel %vm438, %v432, 0
        %465 = vmatpush.msra.mxu0 0.0
        %466 = vmatpush.msra.mxu0 0.0
        %467 = vmatpush.msra.mxu0 0.0
        %468 = vmatpush.msra.mxu0 0.0
        %469 = vmatpush.msra.mxu0 0.0
        %470 = vmatpush.msra.mxu0 0.0
        %471 = vmatpush.msra.mxu0 0.0
        %472 = vmatpush.msra.mxu0 0.0
        %473 = vmatpush.msra.mxu0 0.0
        %474 = vmatpush.msra.mxu0 0.0
        %475 = vmatpush.msra.mxu0 0.0
        %476 = vmatpush.msra.mxu0 0.0
        %477 = vmatpush.msra.mxu0 0.0
        %478 = vmatpush.msra.mxu0 0.0
        %479 = vmatpush.msra.mxu0 %v434
        %480 = vmatpush.msra.mxu0 %v433
        %481 = vmatmul.f32.gmra.mxu0 %v463
        %v482 = vpop.f32.mrf.mxu0
        %v483 = vadd.f32 %v460, %v482
        %484 = vdwg.mxu0
        %v485 = vrcp.pop %v404
        %v486 = vmul.f32 %v404, %v485
        %v487 = vsub.f32 1.0, %v486
        %v488 = vmul.f32 %v485, %v487
        %v489 = vadd.f32 %v485, %v488
        %vm490 = vweird.f32 %v404
        %vm491 = vweird.f32 %v485
        %vm492 = vmor %vm490, %vm491
        %v493 = vsel %vm492, %v485, %v489
        %v494 = vand.u32 2147483647, %v404
        %vm495 = vcmp.eq.f32.partialorder %v494, 8.507059e+37
        %v496 = vand.u32 %v404, 2147483648
        %v497 = vor.u32 1.1754944e-38, %v496
        %v498 = vsel %vm495, %v497, %v493
        %v499 = vmul.f32 %v430, %v498
        %v500 = vadd.f32 %v499, %v483
        %501 = vst [vmem:[%s393] sm:$0xff] %v500
        %s502 = sand.u32 %s177, 1
        %s503 = scalar_lea.sflag [#allocation4], %s502
        %s504 = sand.u32 %s177, 1
        %s505 = smul.addr %s504, 8
        %s506 = scalar_lea.vmem [#allocation13], %s505
        // Predicated region
        $region69: #{tpu_custom_call.1} parent=43 // pred_check
          %p507 = pneg %p187
        $region70: #{tpu_custom_call.1} parent=43 // pred_check_branch
          %509 = sbr.rel (%p507) target = $region72
        $region71: #{tpu_custom_call.1} parent=43 // pred_region
          %511 = vsyncadd %s503, 0
          %s512 = smul.addr %s28, 8
          %s513 = scalar_lea.hbm %s6, %s512
          %s515 = sshll.u32 %s506, 4
          %s516 = int_to_ptr.vmem [resolvable:$true] %s515
          %s517 = sshll.u32 %s513, 4
          %s518 = int_to_ptr.hbm [resolvable:$true] %s517
          %520 = dma.vmem_to_hbm [thread:$0]  %s516, 128, %s518, %s503
        $region72: #{tpu_custom_call.1} parent=43 // pred_fallthru
          _
      $region44: #{tpu_custom_call.1} parent=5 // pred_fallthru
        _
      %p521 = scmp.le.s32.totalorder 2, %s23
      // Predicated region
      $region73: #{tpu_custom_call.1} parent=5 // pred_check
        %p522 = pneg %p521
      $region74: #{tpu_custom_call.1} parent=5 // pred_check_branch
        %524 = sbr.rel (%p522) target = $region76
      $region75: #{tpu_custom_call.1} parent=5 // pred_region
        %s525 = ssub.s32 %s23, 2
        // Predicated region
        $region77: #{tpu_custom_call.1} parent=75 // pred_check
          %p526 = pneg %p193
        $region78: #{tpu_custom_call.1} parent=75 // pred_check_branch
          %528 = sbr.rel (%p526) target = $region80
        $region79: #{tpu_custom_call.1} parent=75 // pred_region
          %s529 = sand.u32 %s178, 1
          %s530 = scalar_lea.sflag [#allocation4], %s529
          %s531 = sand.u32 %s178, 1
          %s532 = smul.addr %s531, 8
          %s533 = scalar_lea.vmem [#allocation13], %s532
          %535 = dma.done %s530, 128
        $region80: #{tpu_custom_call.1} parent=75 // pred_fallthru
          _
      $region76: #{tpu_custom_call.1} parent=5 // pred_fallthru
        _
    $region6: #{tpu_custom_call.1} parent=1 // loop_footer
      %s27 = sadd.s32 1, %s23
    $region7: #{tpu_custom_call.1} parent=1 // loop_footer_branch
      %22 = sbr.rel target = $region3
    $region8: #{tpu_custom_call.1} parent=1 // loop_exit
      _
    %536 = vsyncpa [#allocation3], 1
    %s537 = scalar_lea.sflag [#allocation3], 1
    %538 = vsyncpa %s537, 1
    %539 = vsyncpa [#allocation6], 1
    %s540 = scalar_lea.sflag [#allocation6], 1
    %541 = vsyncpa %s540, 1
    %542 = vsyncpa [#allocation9], 1
    %543 = vsyncpa [#allocation12], 1
    %544 = vsyncpa [#allocation4], 1
    %s545 = scalar_lea.sflag [#allocation4], 1
    %546 = vsyncpa %s545, 1

// kernel: tpu_custom_call.1
$region0: #{tpu_custom_call.1}
  #allocation0 [shape = 'u32[]', space=smem, size = 0x4, offset = 0x4, fixed_abs, tag = 'smem constant byte address 0x4 - core index']
  #allocation1 [shape = 'u32[72,128]{1,0:T(1,128)}', space=vmem, size = 0x9000, scoped, tag = 'internal scratch']
  %s0 = inlined_call_operand.hbm [shape: f32[16,32], index: 0, kind: input, shape index: {}]
  %s1 = inlined_call_operand.hbm [shape: f32[16,16], index: 1, kind: input, shape index: {}]
  %s2 = inlined_call_operand.hbm [shape: f32[16,16], index: 2, kind: input, shape index: {}]
  %s3 = inlined_call_operand.hbm [shape: f32[32,128], index: 3, kind: input, shape index: {}]
  %s4 = inlined_call_operand.hbm [shape: f32[16,128], index: 4, kind: input, shape index: {}]
  %s5 = inlined_call_operand.hbm [shape: f32[16,128], index: 5, kind: input, shape index: {}]
  %s6 = inlined_call_operand.hbm [shape: f32[16,128], index: 6, kind: output, shape index: {}]
  %s7 = sld [smem:[#allocation0]]
  $region81: #{tpu_custom_call.1} parent=0
    _
  %s9 = ssub.s32 1, %s7
  %s10 = scalar_select 0, %s9, %s7
  $region1: #{tpu_custom_call.1} parent=0
    #allocation2 [shape = 'u8[8192]{0}', space=vmem, size = 0x2000, scoped, tag = 'input window, operand 0']
    #allocation3 [shape = 's32[2]{0}', space=sflag, size = 0x8, scoped, tag = 'scoped memory for tpu_custom_call.1']
    #allocation4 [shape = 's32[2]{0}', space=sflag, size = 0x8, scoped, tag = 'scoped memory for tpu_custom_call.1']
    #allocation5 [shape = 'u8[8192]{0}', space=vmem, size = 0x2000, scoped, tag = 'input window, operand 1']
    #allocation6 [shape = 's32[2]{0}', space=sflag, size = 0x8, scoped, tag = 'scoped memory for tpu_custom_call.1']
    #allocation7 [shape = 'u8[8192]{0}', space=vmem, size = 0x2000, scoped, tag = 'input window, operand 2']
    #allocation8 [shape = 'u8[16384]{0}', space=vmem, size = 0x4000, scoped, tag = 'input window, operand 3, single buffered']
    #allocation9 [shape = 's32[1]{0}', space=sflag, size = 0x4, scoped, tag = 'scoped memory for tpu_custom_call.1']
    #allocation10 [shape = 'u8[8192]{0}', space=vmem, size = 0x2000, scoped, tag = 'input window, operand 4, single buffered']
    #allocation11 [shape = 'u8[8192]{0}', space=vmem, size = 0x2000, scoped, tag = 'input window, operand 5, single buffered']
    #allocation12 [shape = 's32[1]{0}', space=sflag, size = 0x4, scoped, tag = 'scoped memory for tpu_custom_call.1']
    #allocation13 [shape = 'u8[8192]{0}', space=vmem, size = 0x2000, scoped, tag = 'output window, operand 0']
    %11 = vsyncpa [#allocation3], 0
    %s12 = scalar_lea.sflag [#allocation3], 1
    %13 = vsyncpa %s12, 0
    %14 = vsyncpa [#allocation6], 0
    %s15 = scalar_lea.sflag [#allocation6], 1
    %16 = vsyncpa %s15, 0
    %17 = vsyncpa [#allocation9], 0
    %18 = vsyncpa [#allocation12], 0
    %19 = vsyncpa [#allocation4], 0
    %s20 = scalar_lea.sflag [#allocation4], 1
    %21 = vsyncpa %s20, 0
    loop: start=0, step=1, limit=4
    $region2: #{tpu_custom_call.1} parent=1 // loop_pre_header
      _
    $region3: #{tpu_custom_call.1} parent=1 // loop_header
      %s23 = sphi 0, %s27
      %p24 = scmp.ge.s32.totalorder %s23, 4
      %s33 = sphi 0, %s35
      %s36 = sphi 0, %s33
      %s37 = sphi 0, %s36
      %s53 = sphi 0, %s37
      %s59 = sphi 0, %s61
      %s62 = sphi 0, %s59
      %s63 = sphi 0, %s62
      %s79 = sphi 0, %s63
      %s85 = sphi 0, %s87
      %s88 = sphi 0, %s85
      %s89 = sphi 0, %s88
      %s105 = sphi 0, %s89
      %s109 = sphi 0, %s109
      %s111 = sphi 0, %s109
      %s112 = sphi 0, %s111
      %s126 = sphi 0, %s112
      %s130 = sphi 0, %s130
      %s132 = sphi 0, %s130
      %s133 = sphi 0, %s132
      %s147 = sphi 0, %s133
      %s151 = sphi 0, %s151
      %s153 = sphi 0, %s151
      %s154 = sphi 0, %s153
      %s168 = sphi 0, %s154
      %s174 = sphi 0, %s176
      %s177 = sphi 0, %s174
      %s178 = sphi 0, %s177
      %s194 = sphi 0, %s178
    $region4: #{tpu_custom_call.1} parent=1 // loop_header_branch
      %26 = sbr.rel (%p24) target = $region8
    $region5: #{tpu_custom_call.1} parent=1 // loop_body
      %s28 = ssub.s32 %s23, 1
      %s29 = ssub.s32 %s23, 2
      %s30 = sadd.s32 %s23, 1
      %s31 = ssub.s32 %s23, %s30
      %p32 = scmp.eq.s32.totalorder %s31, 0
      %s34 = sadd.s32 %s33, 1
      %s35 = scalar_select %p32, %s33, %s34
      %p38 = pneg %p32
      %p39 = scmp.eq.s32.totalorder %s23, 1
      %p40 = por %p38, %p39
      %p41 = scmp.ne.s32.totalorder %s33, %s36
      %p42 = scmp.eq.s32.totalorder %s23, 0
      %p43 = por %p41, %p42
      %p44 = scmp.ne.s32.totalorder %s33, %s36
      %p45 = scmp.eq.s32.totalorder %s28, 1
      %p46 = por %p44, %p45
      %p47 = scmp.ne.s32.totalorder %s36, %s37
      %p48 = scmp.eq.s32.totalorder %s28, 0
      %p49 = por %p47, %p48
      %p50 = scmp.ne.s32.totalorder %s36, %s37
      %p51 = scmp.eq.s32.totalorder %s29, 1
      %p52 = por %p50, %p51
      %p54 = scmp.ne.s32.totalorder %s37, %s53
      %p55 = scmp.eq.s32.totalorder %s29, 0
      %p56 = por %p54, %p55
      %s57 = ssub.s32 %s23, %s30
      %p58 = scmp.eq.s32.totalorder %s57, 0
      %s60 = sadd.s32 %s59, 1
      %s61 = scalar_select %p58, %s59, %s60
      %p64 = pneg %p58
      %p65 = scmp.eq.s32.totalorder %s23, 1
      %p66 = por %p64, %p65
      %p67 = scmp.ne.s32.totalorder %s59, %s62
      %p68 = scmp.eq.s32.totalorder %s23, 0
      %p69 = por %p67, %p68
      %p70 = scmp.ne.s32.totalorder %s59, %s62
      %p71 = scmp.eq.s32.totalorder %s28, 1
      %p72 = por %p70, %p71
      %p73 = scmp.ne.s32.totalorder %s62, %s63
      %p74 = scmp.eq.s32.totalorder %s28, 0
      %p75 = por %p73, %p74
      %p76 = scmp.ne.s32.totalorder %s62, %s63
      %p77 = scmp.eq.s32.totalorder %s29, 1
      %p78 = por %p76, %p77
      %p80 = scmp.ne.s32.totalorder %s63, %s79
      %p81 = scmp.eq.s32.totalorder %s29, 0
      %p82 = por %p80, %p81
      %s83 = ssub.s32 %s23, %s30
      %p84 = scmp.eq.s32.totalorder %s83, 0
      %s86 = sadd.s32 %s85, 1
      %s87 = scalar_select %p84, %s85, %s86
      %p90 = pneg %p84
      %p91 = scmp.eq.s32.totalorder %s23, 1
      %p92 = por %p90, %p91
      %p93 = scmp.ne.s32.totalorder %s85, %s88
      %p94 = scmp.eq.s32.totalorder %s23, 0
      %p95 = por %p93, %p94
      %p96 = scmp.ne.s32.totalorder %s85, %s88
      %p97 = scmp.eq.s32.totalorder %s28, 1
      %p98 = por %p96, %p97
      %p99 = scmp.ne.s32.totalorder %s88, %s89
      %p100 = scmp.eq.s32.totalorder %s28, 0
      %p101 = por %p99, %p100
      %p102 = scmp.ne.s32.totalorder %s88, %s89
      %p103 = scmp.eq.s32.totalorder %s29, 1
      %p104 = por %p102, %p103
      %p106 = scmp.ne.s32.totalorder %s89, %s105
      %p107 = scmp.eq.s32.totalorder %s29, 0
      %p108 = por %p106, %p107
      %s110 = sadd.s32 %s109, 1
      %p113 = scmp.eq.s32.totalorder %s23, 1
      %p114 = scmp.ne.s32.totalorder %s109, %s111
      %p115 = scmp.eq.s32.totalorder %s23, 0
      %p116 = por %p114, %p115
      %p117 = scmp.ne.s32.totalorder %s109, %s111
      %p118 = scmp.eq.s32.totalorder %s28, 1
      %p119 = por %p117, %p118
      %p120 = scmp.ne.s32.totalorder %s111, %s112
      %p121 = scmp.eq.s32.totalorder %s28, 0
      %p122 = por %p120, %p121
      %p123 = scmp.ne.s32.totalorder %s111, %s112
      %p124 = scmp.eq.s32.totalorder %s29, 1
      %p125 = por %p123, %p124
      %p127 = scmp.ne.s32.totalorder %s112, %s126
      %p128 = scmp.eq.s32.totalorder %s29, 0
      %p129 = por %p127, %p128
      %s131 = sadd.s32 %s130, 1
      %p134 = scmp.eq.s32.totalorder %s23, 1
      %p135 = scmp.ne.s32.totalorder %s130, %s132
      %p136 = scmp.eq.s32.totalorder %s23, 0
      %p137 = por %p135, %p136
      %p138 = scmp.ne.s32.totalorder %s130, %s132
      %p139 = scmp.eq.s32.totalorder %s28, 1
      %p140 = por %p138, %p139
      %p141 = scmp.ne.s32.totalorder %s132, %s133
      %p142 = scmp.eq.s32.totalorder %s28, 0
      %p143 = por %p141, %p142
      %p144 = scmp.ne.s32.totalorder %s132, %s133
      %p145 = scmp.eq.s32.totalorder %s29, 1
      %p146 = por %p144, %p145
      %p148 = scmp.ne.s32.totalorder %s133, %s147
      %p149 = scmp.eq.s32.totalorder %s29, 0
      %p150 = por %p148, %p149
      %s152 = sadd.s32 %s151, 1
      %p155 = scmp.eq.s32.totalorder %s23, 1
      %p156 = scmp.ne.s32.totalorder %s151, %s153
      %p157 = scmp.eq.s32.totalorder %s23, 0
      %p158 = por %p156, %p157
      %p159 = scmp.ne.s32.totalorder %s151, %s153
      %p160 = scmp.eq.s32.totalorder %s28, 1
      %p161 = por %p159, %p160
      %p162 = scmp.ne.s32.totalorder %s153, %s154
      %p163 = scmp.eq.s32.totalorder %s28, 0
      %p164 = por %p162, %p163
      %p165 = scmp.ne.s32.totalorder %s153, %s154
      %p166 = scmp.eq.s32.totalorder %s29, 1
      %p167 = por %p165, %p166
      %p169 = scmp.ne.s32.totalorder %s154, %s168
      %p170 = scmp.eq.s32.totalorder %s29, 0
      %p171 = por %p169, %p170
      %s172 = ssub.s32 %s23, %s30
      %p173 = scmp.eq.s32.totalorder %s172, 0
      %s175 = sadd.s32 %s174, 1
      %s176 = scalar_select %p173, %s174, %s175
      %p179 = pneg %p173
      %p180 = scmp.eq.s32.totalorder %s23, 1
      %p181 = por %p179, %p180
      %p182 = scmp.ne.s32.totalorder %s174, %s177
      %p183 = scmp.eq.s32.totalorder %s23, 0
      %p184 = por %p182, %p183
      %p185 = scmp.ne.s32.totalorder %s174, %s177
      %p186 = scmp.eq.s32.totalorder %s28, 1
      %p187 = por %p185, %p186
      %p188 = scmp.ne.s32.totalorder %s177, %s178
      %p189 = scmp.eq.s32.totalorder %s28, 0
      %p190 = por %p188, %p189
      %p191 = scmp.ne.s32.totalorder %s177, %s178
      %p192 = scmp.eq.s32.totalorder %s29, 1
      %p193 = por %p191, %p192
      %p195 = scmp.ne.s32.totalorder %s178, %s194
      %p196 = scmp.eq.s32.totalorder %s29, 0
      %p197 = por %p195, %p196
      %p198 = scmp.le.s32.totalorder 1, %s23
      %p199 = scmp.lt.s32.totalorder %s23, 3
      %p200 = pnand %p198, %p199
      %p201 = pneg %p200
      // Predicated region
      $region9: #{tpu_custom_call.1} parent=5 // pred_check
        _
      $region10: #{tpu_custom_call.1} parent=5 // pred_check_branch
        %203 = sbr.rel (%p200) target = $region12
      $region11: #{tpu_custom_call.1} parent=5 // pred_region
        %s204 = ssub.s32 %s23, 1
        // Predicated region
        $region13: #{tpu_custom_call.1} parent=11 // pred_check
          %p205 = pneg %p122
        $region14: #{tpu_custom_call.1} parent=11 // pred_check_branch
          %207 = sbr.rel (%p205) target = $region16
        $region15: #{tpu_custom_call.1} parent=11 // pred_region
          %209 = vsyncadd [#allocation9], 0
          %s210 = sshll.u32 %s3, 4
          %s211 = int_to_ptr.hbm [resolvable:$true] %s210
          %s212 = sshll.u32 [#allocation8], 4
          %s213 = int_to_ptr.vmem [resolvable:$true] %s212
          %218 = dma.hbm_to_vmem [thread:$0]  %s211, 512, %s213, [#allocation9], 128, 128, 8
        $region16: #{tpu_custom_call.1} parent=11 // pred_fallthru
          _
        // Predicated region
        $region17: #{tpu_custom_call.1} parent=11 // pred_check
          %p219 = pneg %p143
        $region18: #{tpu_custom_call.1} parent=11 // pred_check_branch
          %221 = sbr.rel (%p219) target = $region20
        $region19: #{tpu_custom_call.1} parent=11 // pred_region
          %223 = vsyncadd [#allocation9], 0
          %s224 = sshll.u32 %s4, 4
          %s225 = int_to_ptr.hbm [resolvable:$true] %s224
          %s226 = sshll.u32 [#allocation10], 4
          %s227 = int_to_ptr.vmem [resolvable:$true] %s226
          %232 = dma.hbm_to_vmem [thread:$0]  %s225, 256, %s227, [#allocation9], 128, 128, 8
        $region20: #{tpu_custom_call.1} parent=11 // pred_fallthru
          _
        // Predicated region
        $region21: #{tpu_custom_call.1} parent=11 // pred_check
          %p233 = pneg %p164
        $region22: #{tpu_custom_call.1} parent=11 // pred_check_branch
          %235 = sbr.rel (%p233) target = $region24
        $region23: #{tpu_custom_call.1} parent=11 // pred_region
          %237 = vsyncadd [#allocation12], 0
          %s238 = sshll.u32 %s5, 4
          %s239 = int_to_ptr.hbm [resolvable:$true] %s238
          %s240 = sshll.u32 [#allocation11], 4
          %s241 = int_to_ptr.vmem [resolvable:$true] %s240
          %246 = dma.hbm_to_vmem [thread:$0]  %s239, 256, %s241, [#allocation12], 128, 128, 8
        $region24: #{tpu_custom_call.1} parent=11 // pred_fallthru
          _
      $region12: #{tpu_custom_call.1} parent=5 // pred_fallthru
        _
      %p247 = scmp.lt.s32.totalorder %s23, 2
      // Predicated region
      $region25: #{tpu_custom_call.1} parent=5 // pred_check
        %p248 = pneg %p247
      $region26: #{tpu_custom_call.1} parent=5 // pred_check_branch
        %250 = sbr.rel (%p248) target = $region28
      $region27: #{tpu_custom_call.1} parent=5 // pred_region
        // Predicated region
        $region29: #{tpu_custom_call.1} parent=27 // pred_check
          %p251 = pneg %p43
        $region30: #{tpu_custom_call.1} parent=27 // pred_check_branch
          %253 = sbr.rel (%p251) target = $region32
        $region31: #{tpu_custom_call.1} parent=27 // pred_region
          %s254 = sand.u32 %s33, 1
          %s255 = scalar_lea.sflag [#allocation3], %s254
          %s256 = sand.u32 %s33, 1
          %s257 = smul.addr %s256, 8
          %s258 = scalar_lea.vmem [#allocation2], %s257
          %260 = vsyncadd %s255, 0
          %s261 = smul.addr %s23, 8
          %s262 = scalar_lea.hbm %s0, %s261
          %s264 = sshll.u32 %s262, 4
          %s265 = int_to_ptr.hbm [resolvable:$true] %s264
          %s266 = sshll.u32 %s258, 4
          %s267 = int_to_ptr.vmem [resolvable:$true] %s266
          %269 = dma.hbm_to_vmem [thread:$0]  %s265, 128, %s267, %s255
        $region32: #{tpu_custom_call.1} parent=27 // pred_fallthru
          _
        // Predicated region
        $region33: #{tpu_custom_call.1} parent=27 // pred_check
          %p270 = pneg %p69
        $region34: #{tpu_custom_call.1} parent=27 // pred_check_branch
          %272 = sbr.rel (%p270) target = $region36
        $region35: #{tpu_custom_call.1} parent=27 // pred_region
          %s273 = sand.u32 %s23, 1
          %s274 = scalar_lea.sflag [#allocation6], %s273
          %s275 = sand.u32 %s59, 1
          %s276 = smul.addr %s275, 8
          %s277 = scalar_lea.vmem [#allocation5], %s276
          %279 = vsyncadd %s274, 0
          %s280 = smul.addr %s23, 8
          %s281 = scalar_lea.hbm %s1, %s280
          %s283 = sshll.u32 %s281, 4
          %s284 = int_to_ptr.hbm [resolvable:$true] %s283
          %s285 = sshll.u32 %s277, 4
          %s286 = int_to_ptr.vmem [resolvable:$true] %s285
          %288 = dma.hbm_to_vmem [thread:$0]  %s284, 128, %s286, %s274
        $region36: #{tpu_custom_call.1} parent=27 // pred_fallthru
          _
        // Predicated region
        $region37: #{tpu_custom_call.1} parent=27 // pred_check
          %p289 = pneg %p95
        $region38: #{tpu_custom_call.1} parent=27 // pred_check_branch
          %291 = sbr.rel (%p289) target = $region40
        $region39: #{tpu_custom_call.1} parent=27 // pred_region
          %s292 = sand.u32 %s23, 1
          %s293 = scalar_lea.sflag [#allocation6], %s292
          %s294 = sand.u32 %s85, 1
          %s295 = smul.addr %s294, 8
          %s296 = scalar_lea.vmem [#allocation7], %s295
          %298 = vsyncadd %s293, 0
          %s299 = smul.addr %s23, 8
          %s300 = scalar_lea.hbm %s2, %s299
          %s302 = sshll.u32 %s300, 4
          %s303 = int_to_ptr.hbm [resolvable:$true] %s302
          %s304 = sshll.u32 %s296, 4
          %s305 = int_to_ptr.vmem [resolvable:$true] %s304
          %307 = dma.hbm_to_vmem [thread:$0]  %s303, 128, %s305, %s293
        $region40: #{tpu_custom_call.1} parent=27 // pred_fallthru
          _
      $region28: #{tpu_custom_call.1} parent=5 // pred_fallthru
        _
      %p308 = scmp.le.s32.totalorder 1, %s23
      %p309 = scmp.lt.s32.totalorder %s23, 3
      %p310 = pnand %p308, %p309
      %p311 = pneg %p310
      // Predicated region
      $region41: #{tpu_custom_call.1} parent=5 // pred_check
        _
      $region42: #{tpu_custom_call.1} parent=5 // pred_check_branch
        %313 = sbr.rel (%p310) target = $region44
      $region43: #{tpu_custom_call.1} parent=5 // pred_region
        %s314 = ssub.s32 %s23, 1
        %s315 = sand.u32 %s36, 1
        %s316 = scalar_lea.sflag [#allocation3], %s315
        %s317 = sand.u32 %s36, 1
        %s318 = smul.addr %s317, 8
        %s319 = scalar_lea.vmem [#allocation2], %s318
        // Predicated region
        $region45: #{tpu_custom_call.1} parent=43 // pred_check
          %p320 = pneg %p49
        $region46: #{tpu_custom_call.1} parent=43 // pred_check_branch
          %322 = sbr.rel (%p320) target = $region48
        $region47: #{tpu_custom_call.1} parent=43 // pred_region
          %324 = dma.done %s316, 128
        $region48: #{tpu_custom_call.1} parent=43 // pred_fallthru
          _
        %s325 = sand.u32 %s28, 1
        %s326 = scalar_lea.sflag [#allocation6], %s325
        %s327 = sand.u32 %s62, 1
        %s328 = smul.addr %s327, 8
        %s329 = scalar_lea.vmem [#allocation5], %s328
        // Predicated region
        $region49: #{tpu_custom_call.1} parent=43 // pred_check
          %p330 = pneg %p75
        $region50: #{tpu_custom_call.1} parent=43 // pred_check_branch
          %332 = sbr.rel (%p330) target = $region52
        $region51: #{tpu_custom_call.1} parent=43 // pred_region
          %334 = dma.done %s326, 128
        $region52: #{tpu_custom_call.1} parent=43 // pred_fallthru
          _
        %s335 = sand.u32 %s28, 1
        %s336 = scalar_lea.sflag [#allocation6], %s335
        %s337 = sand.u32 %s88, 1
        %s338 = smul.addr %s337, 8
        %s339 = scalar_lea.vmem [#allocation7], %s338
        // Predicated region
        $region53: #{tpu_custom_call.1} parent=43 // pred_check
          %p340 = pneg %p101
        $region54: #{tpu_custom_call.1} parent=43 // pred_check_branch
          %342 = sbr.rel (%p340) target = $region56
        $region55: #{tpu_custom_call.1} parent=43 // pred_region
          %344 = dma.done %s336, 128
        $region56: #{tpu_custom_call.1} parent=43 // pred_fallthru
          _
        // Predicated region
        $region57: #{tpu_custom_call.1} parent=43 // pred_check
          %p345 = pneg %p122
        $region58: #{tpu_custom_call.1} parent=43 // pred_check_branch
          %347 = sbr.rel (%p345) target = $region60
        $region59: #{tpu_custom_call.1} parent=43 // pred_region
          %349 = dma.done [#allocation9], 512
        $region60: #{tpu_custom_call.1} parent=43 // pred_fallthru
          _
        // Predicated region
        $region61: #{tpu_custom_call.1} parent=43 // pred_check
          %p350 = pneg %p143
        $region62: #{tpu_custom_call.1} parent=43 // pred_check_branch
          %352 = sbr.rel (%p350) target = $region64
        $region63: #{tpu_custom_call.1} parent=43 // pred_region
          %354 = dma.done [#allocation9], 256
        $region64: #{tpu_custom_call.1} parent=43 // pred_fallthru
          _
        // Predicated region
        $region65: #{tpu_custom_call.1} parent=43 // pred_check
          %p355 = pneg %p164
        $region66: #{tpu_custom_call.1} parent=43 // pred_check_branch
          %357 = sbr.rel (%p355) target = $region68
        $region67: #{tpu_custom_call.1} parent=43 // pred_region
          %359 = dma.done [#allocation12], 256
        $region68: #{tpu_custom_call.1} parent=43 // pred_fallthru
          _
        %s360 = sand.u32 %s36, 1
        %s361 = scalar_lea.sflag [#allocation3], %s360
        %s362 = sand.u32 %s36, 1
        %s363 = smul.addr %s362, 8
        %s364 = scalar_lea.vmem [#allocation2], %s363
        %p365 = pneg %p49
        %p366 = pneg %p46
        %s367 = sand.u32 %s28, 1
        %s368 = scalar_lea.sflag [#allocation6], %s367
        %s369 = sand.u32 %s62, 1
        %s370 = smul.addr %s369, 8
        %s371 = scalar_lea.vmem [#allocation5], %s370
        %p372 = pneg %p75
        %p373 = pneg %p72
        %s374 = sand.u32 %s28, 1
        %s375 = scalar_lea.sflag [#allocation6], %s374
        %s376 = sand.u32 %s88, 1
        %s377 = smul.addr %s376, 8
        %s378 = scalar_lea.vmem [#allocation7], %s377
        %p379 = pneg %p101
        %p380 = pneg %p98
        %p381 = pneg %p122
        %p382 = pneg %p119
        %p383 = pneg %p143
        %p384 = pneg %p140
        %p385 = pneg %p164
        %p386 = pneg %p161
        %p387 = pneg %p190
        %p388 = pneg %p187
        %s389 = sand.u32 %s177, 1
        %s390 = scalar_lea.sflag [#allocation4], %s389
        %s391 = sand.u32 %s177, 1
        %s392 = smul.addr %s391, 8
        %s393 = scalar_lea.vmem [#allocation13], %s392
        %v394 = vld [vmem:[%s319] sm:$0xff]
        %vm395 = vcmask 261120
        %v396 = vsel %vm395, %v394, -inf
        %397 = vmax.xlane.f32.xlu0 %v396
        %v398 = vpop.xlane.xlu0 %397
        %v399 = vsub.f32 %v394, %v398
        %v400 = vmul.f32 %v399, 1.442695
        %v401 = vpow.pop %v400
        %v402 = vsel %vm395, %v401, 0.0
        %403 = vadd.xlane.f32.xlu0 %v402
        %v404 = vpop.xlane.xlu0 %403
        %v405 = vld [vmem:[#allocation8] sm:$0xff]
        %v406 = vld [vmem:[#allocation8 + $0x8] sm:$0xff]
        %v407 = vld [vmem:[#allocation8 + $0x10] sm:$0xff]
        %v408 = vld [vmem:[#allocation8 + $0x18] sm:$0xff]
        %v410 = vsel %vm395, %v401, 0
        %412 = vmatpush.msra.mxu0 0.0
        %413 = vmatpush.msra.mxu0 0.0
        %414 = vmatpush.msra.mxu0 0.0
        %415 = vmatpush.msra.mxu0 0.0
        %416 = vmatpush.msra.mxu0 0.0
        %417 = vmatpush.msra.mxu0 0.0
        %418 = vmatpush.msra.mxu0 0.0
        %419 = vmatpush.msra.mxu0 0.0
        %420 = vmatpush.msra.mxu0 0.0
        %421 = vmatpush.msra.mxu0 0.0
        %422 = vmatpush.msra.mxu0 0.0
        %423 = vmatpush.msra.mxu0 0.0
        %424 = vmatpush.msra.mxu0 %v408
        %425 = vmatpush.msra.mxu0 %v407
        %426 = vmatpush.msra.mxu0 %v406
        %427 = vmatpush.msra.mxu0 %v405
        %428 = vmatmul.f32.gmra.mxu0 %v410
        %v429 = vpop.f32.mrf.mxu0
        %v430 = vadd.f32 0.0, %v429
        %431 = vdwg.mxu0
        %v432 = vld [vmem:[%s329] sm:$0xff]
        %v433 = vld [vmem:[#allocation10] sm:$0xff]
        %v434 = vld [vmem:[#allocation10 + $0x8] sm:$0xff]
        %v435 = vld [vmem:[%s339] sm:$0xff]
        %v436 = vld [vmem:[#allocation11] sm:$0xff]
        %v437 = vld [vmem:[#allocation11 + $0x8] sm:$0xff]
        %vm438 = vcmask 130048
        %v440 = vsel %vm438, %v435, 0
        %442 = vmatpush.msra.mxu0 0.0
        %443 = vmatpush.msra.mxu0 0.0
        %444 = vmatpush.msra.mxu0 0.0
        %445 = vmatpush.msra.mxu0 0.0
        %446 = vmatpush.msra.mxu0 0.0
        %447 = vmatpush.msra.mxu0 0.0
        %448 = vmatpush.msra.mxu0 0.0
        %449 = vmatpush.msra.mxu0 0.0
        %450 = vmatpush.msra.mxu0 0.0
        %451 = vmatpush.msra.mxu0 0.0
        %452 = vmatpush.msra.mxu0 0.0
        %453 = vmatpush.msra.mxu0 0.0
        %454 = vmatpush.msra.mxu0 0.0
        %455 = vmatpush.msra.mxu0 0.0
        %456 = vmatpush.msra.mxu0 %v437
        %457 = vmatpush.msra.mxu0 %v436
        %458 = vmatmul.f32.gmra.mxu0 %v440
        %v459 = vpop.f32.mrf.mxu0
        %v460 = vadd.f32 0.0, %v459
        %461 = vdwg.mxu0
        %v463 = vsel %vm438, %v432, 0
        %465 = vmatpush.msra.mxu0 0.0
        %466 = vmatpush.msra.mxu0 0.0
        %467 = vmatpush.msra.mxu0 0.0
        %468 = vmatpush.msra.mxu0 0.0
        %469 = vmatpush.msra.mxu0 0.0
        %470 = vmatpush.msra.mxu0 0.0
        %471 = vmatpush.msra.mxu0 0.0
        %472 = vmatpush.msra.mxu0 0.0
        %473 = vmatpush.msra.mxu0 0.0
        %474 = vmatpush.msra.mxu0 0.0
        %475 = vmatpush.msra.mxu0 0.0
        %476 = vmatpush.msra.mxu0 0.0
        %477 = vmatpush.msra.mxu0 0.0
        %478 = vmatpush.msra.mxu0 0.0
        %479 = vmatpush.msra.mxu0 %v434
        %480 = vmatpush.msra.mxu0 %v433
        %481 = vmatmul.f32.gmra.mxu0 %v463
        %v482 = vpop.f32.mrf.mxu0
        %v483 = vadd.f32 %v460, %v482
        %484 = vdwg.mxu0
        %v485 = vrcp.pop %v404
        %v486 = vmul.f32 %v404, %v485
        %v487 = vsub.f32 1.0, %v486
        %v488 = vmul.f32 %v485, %v487
        %v489 = vadd.f32 %v485, %v488
        %vm490 = vweird.f32 %v404
        %vm491 = vweird.f32 %v485
        %vm492 = vmor %vm490, %vm491
        %v493 = vsel %vm492, %v485, %v489
        %v494 = vand.u32 2147483647, %v404
        %vm495 = vcmp.eq.f32.partialorder %v494, 8.507059e+37
        %v496 = vand.u32 %v404, 2147483648
        %v497 = vor.u32 1.1754944e-38, %v496
        %v498 = vsel %vm495, %v497, %v493
        %v499 = vmul.f32 %v430, %v498
        %v500 = vadd.f32 %v499, %v483
        %501 = vst [vmem:[%s393] sm:$0xff] %v500
        %s502 = sand.u32 %s177, 1
        %s503 = scalar_lea.sflag [#allocation4], %s502
        %s504 = sand.u32 %s177, 1
        %s505 = smul.addr %s504, 8
        %s506 = scalar_lea.vmem [#allocation13], %s505
        // Predicated region
        $region69: #{tpu_custom_call.1} parent=43 // pred_check
          %p507 = pneg %p187
        $region70: #{tpu_custom_call.1} parent=43 // pred_check_branch
          %509 = sbr.rel (%p507) target = $region72
        $region71: #{tpu_custom_call.1} parent=43 // pred_region
          %511 = vsyncadd %s503, 0
          %s512 = smul.addr %s28, 8
          %s513 = scalar_lea.hbm %s6, %s512
          %s515 = sshll.u32 %s506, 4
          %s516 = int_to_ptr.vmem [resolvable:$true] %s515
          %s517 = sshll.u32 %s513, 4
          %s518 = int_to_ptr.hbm [resolvable:$true] %s517
          %520 = dma.vmem_to_hbm [thread:$0]  %s516, 128, %s518, %s503
        $region72: #{tpu_custom_call.1} parent=43 // pred_fallthru
          _
      $region44: #{tpu_custom_call.1} parent=5 // pred_fallthru
        _
      %p521 = scmp.le.s32.totalorder 2, %s23
      // Predicated region
      $region73: #{tpu_custom_call.1} parent=5 // pred_check
        %p522 = pneg %p521
      $region74: #{tpu_custom_call.1} parent=5 // pred_check_branch
        %524 = sbr.rel (%p522) target = $region76
      $region75: #{tpu_custom_call.1} parent=5 // pred_region
        %s525 = ssub.s32 %s23, 2
        // Predicated region
        $region77: #{tpu_custom_call.1} parent=75 // pred_check
          %p526 = pneg %p193
        $region78: #{tpu_custom_call.1} parent=75 // pred_check_branch
          %528 = sbr.rel (%p526) target = $region80
        $region79: #{tpu_custom_call.1} parent=75 // pred_region
          %s529 = sand.u32 %s178, 1
          %s530 = scalar_lea.sflag [#allocation4], %s529
          %s531 = sand.u32 %s178, 1
          %s532 = smul.addr %s531, 8
          %s533 = scalar_lea.vmem [#allocation13], %s532
          %535 = dma.done %s530, 128
        $region80: #{tpu_custom_call.1} parent=75 // pred_fallthru
          _
      $region76: #{tpu_custom_call.1} parent=5 // pred_fallthru
        _
    $region6: #{tpu_custom_call.1} parent=1 // loop_footer
      %s27 = sadd.s32 1, %s23
    $region7: #{tpu_custom_call.1} parent=1 // loop_footer_branch
      %22 = sbr.rel target = $region3
    $region8: #{tpu_custom_call.1} parent=1 // loop_exit
      _
    %536 = vsyncpa [#allocation3], 1
    %s537 = scalar_lea.sflag [#allocation3], 1
    %538 = vsyncpa %s537, 1
    %539 = vsyncpa [#allocation6], 1
    %s540 = scalar_lea.sflag [#allocation6], 1
    %541 = vsyncpa %s540, 1
    %542 = vsyncpa [#allocation9], 1
    %543 = vsyncpa [#allocation12], 1
    %544 = vsyncpa [#allocation4], 1
    %s545 = scalar_lea.sflag [#allocation4], 1
    %546 = vsyncpa %s545, 1

</llo_original>
